<compile_context>
chip_gen: v5e
topology: v5e:2x2
jax: 0.10.0
libtpu: 0.0.40
codegen_flags: <defaults>
</compile_context>

<pallas_src>
import jax
import jax.numpy as jnp
from jax.experimental import pallas as pl
from jax.experimental.pallas import tpu as pltpu

LANE = 128      # TPU vreg lane width (last dim)
SUBLANE = 8     # f32 sublane group (second-to-last dim)

HIDDEN1 = 40
HIDDEN2 = 20

DEFAULT_TILE_B = 2048   # big tiles amortize ~0.35us/grid-step overhead


def _round_up(x, m):
    return (x + m - 1) // m * m


def dqn_kernel(x_ref, w1_ref, b1_ref, w2_ref, b2_ref, w3_ref, b3_ref, out_ref):
    # x is narrow (tile_b, n_obs); weights are resident in VMEM. Matmuls
    # accumulate in f32 on the MXU; bias add + ReLU run in f32 on the VPU
    # (safe on v5e, which has no bf16 VALU). Any bf16 cast of x happens here,
    # after the VMEM load, so the wrapper never writes an extra HBM copy.
    w1 = w1_ref[...]
    x = x_ref[...].astype(w1.dtype)          # no-op in the f32 path
    h1 = jnp.dot(x, w1, preferred_element_type=jnp.float32)
    h1 = jnp.maximum(h1 + b1_ref[...], 0.0)

    w2 = w2_ref[...]
    h2 = jnp.dot(h1.astype(w2.dtype), w2, preferred_element_type=jnp.float32)
    h2 = jnp.maximum(h2 + b2_ref[...], 0.0)

    w3 = w3_ref[...]
    h3 = jnp.dot(h2.astype(w3.dtype), w3, preferred_element_type=jnp.float32)
    out_ref[...] = (h3 + b3_ref[...]).astype(out_ref.dtype)


def init_params(key, n_observations, n_actions):
    """PyTorch-style uniform fan-in init; weights stored (in, out), biases (out,)."""
    def linear(key, fan_in, fan_out):
        kw, kb = jax.random.split(key)
        bound = float(fan_in) ** -0.5
        w = jax.random.uniform(kw, (fan_in, fan_out), jnp.float32, -bound, bound)
        b = jax.random.uniform(kb, (fan_out,), jnp.float32, -bound, bound)
        return w, b

    k1, k2, k3 = jax.random.split(key, 3)
    w1, b1 = linear(k1, n_observations, HIDDEN1)
    w2, b2 = linear(k2, HIDDEN1, HIDDEN2)
    w3, b3 = linear(k3, HIDDEN2, n_actions)
    return {"w1": w1, "b1": b1, "w2": w2, "b2": b2, "w3": w3, "b3": b3}


def prepare_params(params, compute_dtype=jnp.float32):
    """Pad ONLY the hidden dims (40/20) up to 128 lanes; keep n_obs (K of layer
    1) and n_actions (N of layer 3) at their real sizes so HBM traffic for x
    and out stays narrow. Zero padding is inert (zero rows/cols, zero biases,
    ReLU(0)=0). Pass compute_dtype=jnp.bfloat16 on v6e/v7x for large-batch
    inference; biases stay f32 and matmuls still accumulate in f32."""
    def pad_w(w, pad_in, pad_out):
        fi, fo = w.shape
        ti = _round_up(fi, LANE) if pad_in else fi
        to = _round_up(fo, LANE) if pad_out else fo
        out = jnp.zeros((ti, to), compute_dtype)
        return out.at[:fi, :fo].set(w.astype(compute_dtype))

    def pad_b(b, pad_out):
        fo = b.shape[-1]
        to = _round_up(fo, LANE) if pad_out else fo
        out = jnp.zeros((1, to), jnp.float32)
        return out.at[0, :fo].set(b.astype(jnp.float32).reshape(-1))

    return {
        "w1": pad_w(params["w1"], pad_in=False, pad_out=True),   # (n_obs, 128)
        "b1": pad_b(params["b1"], pad_out=True),                 # (1, 128)
        "w2": pad_w(params["w2"], pad_in=True, pad_out=True),    # (128, 128)
        "b2": pad_b(params["b2"], pad_out=True),                 # (1, 128)
        "w3": pad_w(params["w3"], pad_in=True, pad_out=False),   # (128, n_actions)
        "b3": pad_b(params["b3"], pad_out=False),                # (1, n_actions)
    }


def _pick_tile_b(batch):
    tile = min(DEFAULT_TILE_B, _round_up(batch, SUBLANE))
    # Keep >= 2 grid steps when the batch allows, so v7x's 2 TensorCores both
    # get work (harmless on v5e/v6e; tiles stay a multiple of the sublane).
    if batch >= 2 * SUBLANE:
        tile = min(tile, _round_up(pl.cdiv(batch, 2), SUBLANE))
    return max(tile, SUBLANE)


def dqn_forward(x, padded_params, *, tile_b=None):
    """x: (batch, n_observations). padded_params: from prepare_params."""
    batch, n_obs = x.shape
    w1, b1 = padded_params["w1"], padded_params["b1"]
    w2, b2 = padded_params["w2"], padded_params["b2"]
    w3, b3 = padded_params["w3"], padded_params["b3"]
    assert w1.shape[0] == n_obs
    n_actions = w3.shape[1]

    if tile_b is None:
        tile_b = _pick_tile_b(batch)
    tile_b = max(SUBLANE, _round_up(tile_b, SUBLANE))

    grid = (pl.cdiv(batch, tile_b),)   # partial last block handled by Pallas

    def resident(shape):
        # Same block every grid step -> weight/bias stays resident in VMEM.
        return pl.BlockSpec(shape, lambda i: (0, 0))

    flops = 2 * batch * (n_obs * w1.shape[1]
                         + w2.shape[0] * w2.shape[1]
                         + w3.shape[0] * n_actions)
    bytes_accessed = (
        int(x.size) * x.dtype.itemsize
        + batch * n_actions * 4
        + sum(int(p.size) * p.dtype.itemsize for p in (w1, b1, w2, b2, w3, b3)))

    return pl.pallas_call(
        dqn_kernel,
        out_shape=jax.ShapeDtypeStruct((batch, n_actions), jnp.float32),
        grid=grid,
        in_specs=[
            pl.BlockSpec((tile_b, n_obs), lambda i: (i, 0)),
            resident(w1.shape), resident(b1.shape),
            resident(w2.shape), resident(b2.shape),
            resident(w3.shape), resident(b3.shape),
        ],
        out_specs=pl.BlockSpec((tile_b, n_actions), lambda i: (i, 0)),
        compiler_params=pltpu.CompilerParams(
            dimension_semantics=("parallel",)),
        cost_estimate=pl.CostEstimate(
            flops=flops, transcendentals=0, bytes_accessed=bytes_accessed),
    )(x, w1, b1, w2, b2, w3, b3)


def dqn_reference(x, params):
    h1 = jnp.maximum(x @ params["w1"] + params["b1"], 0.0)
    h2 = jnp.maximum(h1 @ params["w2"] + params["b2"], 0.0)
    return h2 @ params["w3"] + params["b3"]


if __name__ == "__main__":
    key = jax.random.PRNGKey(0)
    k_params, k_x = jax.random.split(key)

    batch = 4
    n_observations = 8
    n_actions = 4

    params = init_params(k_params, n_observations, n_actions)
    padded = prepare_params(params, compute_dtype=jnp.float32)
    x = jax.random.normal(k_x, (batch, n_observations), jnp.float32)

    out = dqn_forward(x, padded)
    out = jax.block_until_ready(out)

    ref = dqn_reference(x, params)
    assert out.shape == (batch, n_actions)
    assert jnp.allclose(out, ref, atol=1e-5, rtol=1e-5), "mismatch vs reference"

    print("KERNEL_OK")
</pallas_src>

<mosaic_0001>
module attributes {stable_mosaic.version = 11 : i64} {
  func.func @dqn_kernel(%arg0: i32, %arg1: memref<8x8xf32, #tpu.memory_space<vmem>>, %arg2: memref<8x128xf32, #tpu.memory_space<vmem>>, %arg3: memref<1x128xf32, #tpu.memory_space<vmem>>, %arg4: memref<128x128xf32, #tpu.memory_space<vmem>>, %arg5: memref<1x128xf32, #tpu.memory_space<vmem>>, %arg6: memref<128x4xf32, #tpu.memory_space<vmem>>, %arg7: memref<1x4xf32, #tpu.memory_space<vmem>>, %arg8: memref<8x4xf32, #tpu.memory_space<vmem>>) attributes {dimension_semantics = [#tpu.dimension_semantics<parallel>], iteration_bounds = array<i64: 1>, scalar_prefetch = 0 : i64, scratch_operands = 0 : i64, tpu.core_type = #tpu.core_type<tc>, window_params = [{transform_indices = @transform_0, window_bounds = array<i64: 8, 8>}, {pipeline_mode = #tpu.pipeline_mode<synchronous>, transform_indices = @transform_1, window_bounds = array<i64: 8, 128>}, {pipeline_mode = #tpu.pipeline_mode<synchronous>, transform_indices = @transform_2, window_bounds = array<i64: 1, 128>}, {pipeline_mode = #tpu.pipeline_mode<synchronous>, transform_indices = @transform_3, window_bounds = array<i64: 128, 128>}, {pipeline_mode = #tpu.pipeline_mode<synchronous>, transform_indices = @transform_4, window_bounds = array<i64: 1, 128>}, {pipeline_mode = #tpu.pipeline_mode<synchronous>, transform_indices = @transform_5, window_bounds = array<i64: 128, 4>}, {pipeline_mode = #tpu.pipeline_mode<synchronous>, transform_indices = @transform_6, window_bounds = array<i64: 1, 4>}, {transform_indices = @transform_7, window_bounds = array<i64: 8, 4>}]} {
    %c0 = arith.constant 0 : index
    %c0_0 = arith.constant 0 : index
    %0 = vector.load %arg2[%c0, %c0_0] : memref<8x128xf32, #tpu.memory_space<vmem>>, vector<8x128xf32>
    %c0_1 = arith.constant 0 : index
    %c0_2 = arith.constant 0 : index
    %1 = vector.load %arg1[%c0_1, %c0_2] : memref<8x8xf32, #tpu.memory_space<vmem>>, vector<8x8xf32>
    %cst = arith.constant dense<0.000000e+00> : vector<8x128xf32>
    %2 = tpu.matmul %1, %0, %cst {dimension_numbers = #tpu.dot_dimension_numbers<[1], [0], [0], [1], [0, 0, 1, 1], [], []>} : vector<8x8xf32>, vector<8x128xf32>, vector<8x128xf32> -> vector<8x128xf32>
    %c0_3 = arith.constant 0 : index
    %c0_4 = arith.constant 0 : index
    %3 = vector.load %arg3[%c0_3, %c0_4] : memref<1x128xf32, #tpu.memory_space<vmem>>, vector<1x128xf32>
    %4 = vector.broadcast %3 : vector<1x128xf32> to vector<8x128xf32>
    %5 = arith.addf %2, %4 : vector<8x128xf32>
    %cst_5 = arith.constant 0.000000e+00 : f32
    %6 = vector.broadcast %cst_5 : f32 to vector<8x128xf32>
    %7 = arith.maximumf %5, %6 : vector<8x128xf32>
    %c0_6 = arith.constant 0 : index
    %c0_7 = arith.constant 0 : index
    %8 = vector.load %arg4[%c0_6, %c0_7] : memref<128x128xf32, #tpu.memory_space<vmem>>, vector<128x128xf32>
    %cst_8 = arith.constant dense<0.000000e+00> : vector<8x128xf32>
    %9 = tpu.matmul %7, %8, %cst_8 {dimension_numbers = #tpu.dot_dimension_numbers<[1], [0], [0], [1], [0, 0, 1, 1], [], []>} : vector<8x128xf32>, vector<128x128xf32>, vector<8x128xf32> -> vector<8x128xf32>
    %c0_9 = arith.constant 0 : index
    %c0_10 = arith.constant 0 : index
    %10 = vector.load %arg5[%c0_9, %c0_10] : memref<1x128xf32, #tpu.memory_space<vmem>>, vector<1x128xf32>
    %11 = vector.broadcast %10 : vector<1x128xf32> to vector<8x128xf32>
    %12 = arith.addf %9, %11 : vector<8x128xf32>
    %cst_11 = arith.constant 0.000000e+00 : f32
    %13 = vector.broadcast %cst_11 : f32 to vector<8x128xf32>
    %14 = arith.maximumf %12, %13 : vector<8x128xf32>
    %c0_12 = arith.constant 0 : index
    %c0_13 = arith.constant 0 : index
    %15 = vector.load %arg6[%c0_12, %c0_13] : memref<128x4xf32, #tpu.memory_space<vmem>>, vector<128x4xf32>
    %cst_14 = arith.constant dense<0.000000e+00> : vector<8x4xf32>
    %16 = tpu.matmul %14, %15, %cst_14 {dimension_numbers = #tpu.dot_dimension_numbers<[1], [0], [0], [1], [0, 0, 1, 1], [], []>} : vector<8x128xf32>, vector<128x4xf32>, vector<8x4xf32> -> vector<8x4xf32>
    %c0_15 = arith.constant 0 : index
    %c0_16 = arith.constant 0 : index
    %17 = vector.load %arg7[%c0_15, %c0_16] : memref<1x4xf32, #tpu.memory_space<vmem>>, vector<1x4xf32>
    %18 = vector.broadcast %17 : vector<1x4xf32> to vector<8x4xf32>
    %19 = arith.addf %16, %18 : vector<8x4xf32>
    %c0_17 = arith.constant 0 : index
    %c0_18 = arith.constant 0 : index
    %20 = vector.load %arg8[%c0_17, %c0_18] : memref<8x4xf32, #tpu.memory_space<vmem>>, vector<8x4xf32>
    tpu.vector_store %arg8[%c0_17, %c0_18], %19 {strides = array<i32>} : memref<8x4xf32, #tpu.memory_space<vmem>>, vector<8x4xf32>,
    return
  }
  func.func @transform_0(%arg0: i32) -> (i32, i32) {
    %c0_i32 = arith.constant 0 : i32
    %c0_i32_0 = arith.constant 0 : i32
    return %arg0, %c0_i32 : i32, i32
  }
  func.func @transform_1(%arg0: i32) -> (i32, i32) {
    %c0_i32 = arith.constant 0 : i32
    %c0_i32_0 = arith.constant 0 : i32
    %c0_i32_1 = arith.constant 0 : i32
    return %c0_i32, %c0_i32_0 : i32, i32
  }
  func.func @transform_2(%arg0: i32) -> (i32, i32) {
    %c0_i32 = arith.constant 0 : i32
    %c0_i32_0 = arith.constant 0 : i32
    %c0_i32_1 = arith.constant 0 : i32
    return %c0_i32, %c0_i32_0 : i32, i32
  }
  func.func @transform_3(%arg0: i32) -> (i32, i32) {
    %c0_i32 = arith.constant 0 : i32
    %c0_i32_0 = arith.constant 0 : i32
    %c0_i32_1 = arith.constant 0 : i32
    return %c0_i32, %c0_i32_0 : i32, i32
  }
  func.func @transform_4(%arg0: i32) -> (i32, i32) {
    %c0_i32 = arith.constant 0 : i32
    %c0_i32_0 = arith.constant 0 : i32
    %c0_i32_1 = arith.constant 0 : i32
    return %c0_i32, %c0_i32_0 : i32, i32
  }
  func.func @transform_5(%arg0: i32) -> (i32, i32) {
    %c0_i32 = arith.constant 0 : i32
    %c0_i32_0 = arith.constant 0 : i32
    %c0_i32_1 = arith.constant 0 : i32
    return %c0_i32, %c0_i32_0 : i32, i32
  }
  func.func @transform_6(%arg0: i32) -> (i32, i32) {
    %c0_i32 = arith.constant 0 : i32
    %c0_i32_0 = arith.constant 0 : i32
    %c0_i32_1 = arith.constant 0 : i32
    return %c0_i32, %c0_i32_0 : i32, i32
  }
  func.func @transform_7(%arg0: i32) -> (i32, i32) {
    %c0_i32 = arith.constant 0 : i32
    %c0_i32_0 = arith.constant 0 : i32
    return %arg0, %c0_i32 : i32, i32
  }
}

</mosaic_0001>

<llo_original>
// kernel: tpu_custom_call.1
$region0: #{tpu_custom_call.1}
  #allocation0 [shape = 'u32[]', space=smem, size = 0x4, offset = 0x4, fixed_abs, tag = 'smem constant byte address 0x4 - core index']
  #allocation1 [shape = 'u32[72,128]{1,0:T(1,128)}', space=vmem, size = 0x9000, scoped, tag = 'internal scratch']
  %s0 = inlined_call_operand.vmem [shape: f32[4,8], index: 0, kind: input, shape index: {}]
  %s1 = inlined_call_operand.hbm [shape: f32[8,128], index: 1, kind: input, shape index: {}]
  %s2 = inlined_call_operand.hbm [shape: f32[1,128], index: 2, kind: input, shape index: {}]
  %s3 = inlined_call_operand.vmem [shape: f32[128,128], index: 3, kind: input, shape index: {}]
  %s4 = inlined_call_operand.hbm [shape: f32[1,128], index: 4, kind: input, shape index: {}]
  %s5 = inlined_call_operand.vmem [shape: f32[128,4], index: 5, kind: input, shape index: {}]
  %s6 = inlined_call_operand.vmem [shape: f32[1,4], index: 6, kind: input, shape index: {}]
  %s7 = inlined_call_operand.hbm [shape: f32[4,4], index: 7, kind: output, shape index: {}]
  %s8 = sld [smem:[#allocation0]]
  $region50: #{tpu_custom_call.1} parent=0
    _
  %s10 = ssub.s32 1, %s8
  %s11 = scalar_select 0, %s10, %s8
  $region1: #{tpu_custom_call.1} parent=0
    #allocation2 [shape = 'u8[4096]{0}', space=vmem, size = 0x1000, scoped, tag = 'input window, operand 1, single buffered']
    #allocation3 [shape = 's32[1]{0}', space=sflag, size = 0x4, scoped, tag = 'scoped memory for tpu_custom_call.1']
    #allocation4 [shape = 's32[1]{0}', space=sflag, size = 0x4, scoped, tag = 'scoped memory for tpu_custom_call.1']
    #allocation5 [shape = 'u8[512]{0}', space=vmem, size = 0x400, scoped, tag = 'input window, operand 2, single buffered']
    #allocation6 [shape = 's32[1]{0}', space=sflag, size = 0x4, scoped, tag = 'scoped memory for tpu_custom_call.1']
    #allocation7 [shape = 'u8[512]{0}', space=vmem, size = 0x400, scoped, tag = 'input window, operand 4, single buffered']
    #allocation8 [shape = 'u8[4096]{0}', space=vmem, size = 0x1000, scoped, tag = 'output window, operand 0, single buffered']
    %12 = vsyncpa [#allocation3], 0
    %13 = vsyncpa [#allocation6], 0
    %14 = vsyncpa [#allocation4], 0
    // Predicated region
    $region2: #{tpu_custom_call.1} parent=1 // pred_check
      _
    $region3: #{tpu_custom_call.1} parent=1 // pred_check_branch
      %16 = sbr.rel (0) target = $region5
    $region4: #{tpu_custom_call.1} parent=1 // pred_region
      _
    $region5: #{tpu_custom_call.1} parent=1 // pred_fallthru
      _
    // Predicated region
    $region6: #{tpu_custom_call.1} parent=1 // pred_check
      _
    $region7: #{tpu_custom_call.1} parent=1 // pred_check_branch
      %18 = sbr.rel (0) target = $region9
    $region8: #{tpu_custom_call.1} parent=1 // pred_region
      %20 = vsyncadd [#allocation3], 0
      %s22 = sshll.u32 %s1, 4
      %s23 = int_to_ptr.hbm [resolvable:$true] %s22
      %s24 = sshll.u32 [#allocation2], 4
      %s25 = int_to_ptr.vmem [resolvable:$true] %s24
      %27 = dma.hbm_to_vmem [thread:$0]  %s23, 128, %s25, [#allocation3]
    $region9: #{tpu_custom_call.1} parent=1 // pred_fallthru
      _
    // Predicated region
    $region10: #{tpu_custom_call.1} parent=1 // pred_check
      _
    $region11: #{tpu_custom_call.1} parent=1 // pred_check_branch
      %29 = sbr.rel (0) target = $region13
    $region12: #{tpu_custom_call.1} parent=1 // pred_region
      %31 = vsyncadd [#allocation6], 0
      %s33 = sshll.u32 %s2, 4
      %s34 = int_to_ptr.hbm [resolvable:$true] %s33
      %s35 = sshll.u32 [#allocation5], 4
      %s36 = int_to_ptr.vmem [resolvable:$true] %s35
      %38 = dma.hbm_to_vmem [thread:$0]  %s34, 16, %s36, [#allocation6]
    $region13: #{tpu_custom_call.1} parent=1 // pred_fallthru
      _
    // Predicated region
    $region14: #{tpu_custom_call.1} parent=1 // pred_check
      _
    $region15: #{tpu_custom_call.1} parent=1 // pred_check_branch
      %40 = sbr.rel (0) target = $region17
    $region16: #{tpu_custom_call.1} parent=1 // pred_region
      _
    $region17: #{tpu_custom_call.1} parent=1 // pred_fallthru
      _
    // Predicated region
    $region18: #{tpu_custom_call.1} parent=1 // pred_check
      _
    $region19: #{tpu_custom_call.1} parent=1 // pred_check_branch
      %42 = sbr.rel (0) target = $region21
    $region20: #{tpu_custom_call.1} parent=1 // pred_region
      %44 = vsyncadd [#allocation6], 0
      %s46 = sshll.u32 %s4, 4
      %s47 = int_to_ptr.hbm [resolvable:$true] %s46
      %s48 = sshll.u32 [#allocation7], 4
      %s49 = int_to_ptr.vmem [resolvable:$true] %s48
      %51 = dma.hbm_to_vmem [thread:$0]  %s47, 16, %s49, [#allocation6]
    $region21: #{tpu_custom_call.1} parent=1 // pred_fallthru
      _
    // Predicated region
    $region22: #{tpu_custom_call.1} parent=1 // pred_check
      _
    $region23: #{tpu_custom_call.1} parent=1 // pred_check_branch
      %53 = sbr.rel (0) target = $region25
    $region24: #{tpu_custom_call.1} parent=1 // pred_region
      _
    $region25: #{tpu_custom_call.1} parent=1 // pred_fallthru
      _
    // Predicated region
    $region26: #{tpu_custom_call.1} parent=1 // pred_check
      _
    $region27: #{tpu_custom_call.1} parent=1 // pred_check_branch
      %55 = sbr.rel (0) target = $region29
    $region28: #{tpu_custom_call.1} parent=1 // pred_region
      _
    $region29: #{tpu_custom_call.1} parent=1 // pred_fallthru
      _
    // Predicated region
    $region30: #{tpu_custom_call.1} parent=1 // pred_check
      _
    $region31: #{tpu_custom_call.1} parent=1 // pred_check_branch
      %57 = sbr.rel (0) target = $region33
    $region32: #{tpu_custom_call.1} parent=1 // pred_region
      %59 = dma.done [#allocation3], 128
    $region33: #{tpu_custom_call.1} parent=1 // pred_fallthru
      _
    // Predicated region
    $region34: #{tpu_custom_call.1} parent=1 // pred_check
      _
    $region35: #{tpu_custom_call.1} parent=1 // pred_check_branch
      %61 = sbr.rel (0) target = $region37
    $region36: #{tpu_custom_call.1} parent=1 // pred_region
      %63 = dma.done [#allocation6], 16
    $region37: #{tpu_custom_call.1} parent=1 // pred_fallthru
      _
    // Predicated region
    $region38: #{tpu_custom_call.1} parent=1 // pred_check
      _
    $region39: #{tpu_custom_call.1} parent=1 // pred_check_branch
      %65 = sbr.rel (0) target = $region41
    $region40: #{tpu_custom_call.1} parent=1 // pred_region
      %67 = dma.done [#allocation6], 16
    $region41: #{tpu_custom_call.1} parent=1 // pred_fallthru
      _
    %v68 = vld [vmem:[#allocation2] sm:$0xff]
    %v69 = vld [vmem:[%s0] sm:$0xff]
    %v70 = vld [vmem:[#allocation5] sm:$0x1]
    %v72 = vperm.slane %v70, 0
    %vm74 = vcmask 64512
    %v76 = vsel %vm74, %v69, 0
    %78 = vmatpush.msra.mxu0 0.0
    %79 = vmatpush.msra.mxu0 0.0
    %80 = vmatpush.msra.mxu0 0.0
    %81 = vmatpush.msra.mxu0 0.0
    %82 = vmatpush.msra.mxu0 0.0
    %83 = vmatpush.msra.mxu0 0.0
    %84 = vmatpush.msra.mxu0 0.0
    %85 = vmatpush.msra.mxu0 0.0
    %86 = vmatpush.msra.mxu0 0.0
    %87 = vmatpush.msra.mxu0 0.0
    %88 = vmatpush.msra.mxu0 0.0
    %89 = vmatpush.msra.mxu0 0.0
    %90 = vmatpush.msra.mxu0 0.0
    %91 = vmatpush.msra.mxu0 0.0
    %92 = vmatpush.msra.mxu0 0.0
    %93 = vmatpush.msra.mxu0 %v68
    %94 = vmatmul.f32.gmra.mxu0 %v76
    %v95 = vpop.f32.mrf.mxu0
    %v96 = vadd.f32 %v72, %v95
    %97 = vdwg.mxu0
    %v98 = vmax.f32 %v96, 0.0
    %v99 = vld [vmem:[%s3] sm:$0xff]
    %v100 = vld [vmem:[%s3 + $0x8] sm:$0xff]
    %v101 = vld [vmem:[%s3 + $0x10] sm:$0xff]
    %v102 = vld [vmem:[%s3 + $0x18] sm:$0xff]
    %v103 = vld [vmem:[%s3 + $0x20] sm:$0xff]
    %v104 = vld [vmem:[%s3 + $0x28] sm:$0xff]
    %v105 = vld [vmem:[%s3 + $0x30] sm:$0xff]
    %v106 = vld [vmem:[%s3 + $0x38] sm:$0xff]
    %v107 = vld [vmem:[%s3 + $0x40] sm:$0xff]
    %v108 = vld [vmem:[%s3 + $0x48] sm:$0xff]
    %v109 = vld [vmem:[%s3 + $0x50] sm:$0xff]
    %v110 = vld [vmem:[%s3 + $0x58] sm:$0xff]
    %v111 = vld [vmem:[%s3 + $0x60] sm:$0xff]
    %v112 = vld [vmem:[%s3 + $0x68] sm:$0xff]
    %v113 = vld [vmem:[%s3 + $0x70] sm:$0xff]
    %v114 = vld [vmem:[%s3 + $0x78] sm:$0xff]
    %v115 = vld [vmem:[#allocation7] sm:$0x1]
    %v117 = vperm.slane %v115, 0
    %119 = vmatpush.msra.mxu0 %v114
    %120 = vmatpush.msra.mxu0 %v113
    %121 = vmatpush.msra.mxu0 %v112
    %122 = vmatpush.msra.mxu0 %v111
    %123 = vmatpush.msra.mxu0 %v110
    %124 = vmatpush.msra.mxu0 %v109
    %125 = vmatpush.msra.mxu0 %v108
    %126 = vmatpush.msra.mxu0 %v107
    %127 = vmatpush.msra.mxu0 %v106
    %128 = vmatpush.msra.mxu0 %v105
    %129 = vmatpush.msra.mxu0 %v104
    %130 = vmatpush.msra.mxu0 %v103
    %131 = vmatpush.msra.mxu0 %v102
    %132 = vmatpush.msra.mxu0 %v101
    %133 = vmatpush.msra.mxu0 %v100
    %134 = vmatpush.msra.mxu0 %v99
    %135 = vmatmul.f32.gmra.mxu0 %v98
    %v136 = vpop.f32.mrf.mxu0
    %v137 = vadd.f32 %v117, %v136
    %138 = vdwg.mxu0
    %v139 = vmax.f32 %v137, 0.0
    %v140 = vld [vmem:[%s5] sm:$0xff]
    %v141 = vld [vmem:[%s5 + $0x8] sm:$0xff]
    %v142 = vld [vmem:[%s5 + $0x10] sm:$0xff]
    %v143 = vld [vmem:[%s5 + $0x18] sm:$0xff]
    %v144 = vld [vmem:[%s5 + $0x20] sm:$0xff]
    %v145 = vld [vmem:[%s5 + $0x28] sm:$0xff]
    %v146 = vld [vmem:[%s5 + $0x30] sm:$0xff]
    %v147 = vld [vmem:[%s5 + $0x38] sm:$0xff]
    %v148 = vld [vmem:[%s5 + $0x40] sm:$0xff]
    %v149 = vld [vmem:[%s5 + $0x48] sm:$0xff]
    %v150 = vld [vmem:[%s5 + $0x50] sm:$0xff]
    %v151 = vld [vmem:[%s5 + $0x58] sm:$0xff]
    %v152 = vld [vmem:[%s5 + $0x60] sm:$0xff]
    %v153 = vld [vmem:[%s5 + $0x68] sm:$0xff]
    %v154 = vld [vmem:[%s5 + $0x70] sm:$0xff]
    %v155 = vld [vmem:[%s5 + $0x78] sm:$0xff]
    %v156 = vld [vmem:[%s6] sm:$0x1]
    %v158 = vperm.slane %v156, 0
    %160 = vmatpush.msra.mxu0 %v155
    %161 = vmatpush.msra.mxu0 %v154
    %162 = vmatpush.msra.mxu0 %v153
    %163 = vmatpush.msra.mxu0 %v152
    %164 = vmatpush.msra.mxu0 %v151
    %165 = vmatpush.msra.mxu0 %v150
    %166 = vmatpush.msra.mxu0 %v149
    %167 = vmatpush.msra.mxu0 %v148
    %168 = vmatpush.msra.mxu0 %v147
    %169 = vmatpush.msra.mxu0 %v146
    %170 = vmatpush.msra.mxu0 %v145
    %171 = vmatpush.msra.mxu0 %v144
    %172 = vmatpush.msra.mxu0 %v143
    %173 = vmatpush.msra.mxu0 %v142
    %174 = vmatpush.msra.mxu0 %v141
    %175 = vmatpush.msra.mxu0 %v140
    %176 = vmatmul.f32.gmra.mxu0 %v139
    %v177 = vpop.f32.mrf.mxu0
    %v178 = vadd.f32 %v158, %v177
    %179 = vdwg.mxu0
    %vm180 = vcmask 31744
    %181 = vst.msk [vmem:[#allocation8] sm:$0xff] %vm180, %v178
    // Predicated region
    $region42: #{tpu_custom_call.1} parent=1 // pred_check
      _
    $region43: #{tpu_custom_call.1} parent=1 // pred_check_branch
      %183 = sbr.rel (0) target = $region45
    $region44: #{tpu_custom_call.1} parent=1 // pred_region
      %185 = vsyncadd [#allocation4], 64
      %s186 = sshll.u32 [#allocation8], 4
      %s187 = int_to_ptr.vmem [resolvable:$true] %s186
      %s188 = sshll.u32 %s7, 4
      %s189 = int_to_ptr.hbm [resolvable:$true] %s188
      %194 = dma.vmem_to_hbm [thread:$0]  %s187, 64, %s189, [#allocation4], 64, 64, 4
    $region45: #{tpu_custom_call.1} parent=1 // pred_fallthru
      _
    // Predicated region
    $region46: #{tpu_custom_call.1} parent=1 // pred_check
      _
    $region47: #{tpu_custom_call.1} parent=1 // pred_check_branch
      %196 = sbr.rel (0) target = $region49
    $region48: #{tpu_custom_call.1} parent=1 // pred_region
      %198 = dma.done [#allocation4], 128
    $region49: #{tpu_custom_call.1} parent=1 // pred_fallthru
      _
    %199 = vsyncpa [#allocation3], 1
    %200 = vsyncpa [#allocation6], 1
    %201 = vsyncpa [#allocation4], 1

</llo_original>
